<compile_context>
chip_gen: v5e
topology: v5e:2x2
jax: 0.10.0
libtpu: 0.0.40
codegen_flags: <defaults>
</compile_context>

<pallas_src>
import functools
import math

import jax
import jax.numpy as jnp
from jax.experimental import pallas as pl
from jax.experimental.pallas import tpu as pltpu

_LOG_SQRT_2PI = 0.5 * math.log(2.0 * math.pi)


def _softplus(x):
    # numerically stable softplus: max(x, 0) + log1p(exp(-|x|))
    return jnp.maximum(x, 0.0) + jnp.log1p(jnp.exp(-jnp.abs(x)))


def make_policy_kernel(action_bound, action_dim):
    A = action_dim

    def policy_kernel(x_ref, eps_ref, w1_ref, w2_ref, wh_ref,
                      b1_ref, b2_ref, bh_ref, act_ref, logp_ref):
        x = x_ref[...]                           # [tB, S]  f32
        eps = eps_ref[...]                       # [tB, A]  f32 standard-normal noise

        wdt = w1_ref.dtype                       # f32 (exact) or bf16 (v6e/v7x fast path)

        # mlp: Linear -> ReLU -> Linear -> ReLU   (f32 accumulation on the MXU)
        h = jnp.dot(x.astype(wdt), w1_ref[...],
                    preferred_element_type=jnp.float32) + b1_ref[...]
        h = jnp.maximum(h, 0.0)
        h = jnp.dot(h.astype(wdt), w2_ref[...],
                    preferred_element_type=jnp.float32) + b2_ref[...]
        h = jnp.maximum(h, 0.0)                  # [tB, H]

        # fused heads: [mu | pre_std] in a single matmul
        heads = jnp.dot(h.astype(wdt), wh_ref[...],
                        preferred_element_type=jnp.float32) + bh_ref[...]   # [tB, 2A]
        mu = heads[:, :A]
        std = _softplus(heads[:, A:])

        # dist = Normal(mu, std); z = dist.rsample(); action = tanh(z)
        z = mu + std * eps
        action = jnp.tanh(z)

        # dist.log_prob(z): (z - mu)/std == eps, so use eps directly (no divide).
        log_prob = -0.5 * jnp.square(eps) - jnp.log(std) - _LOG_SQRT_2PI
        # tanh-squash correction — matches the PyTorch reference verbatim
        # (it applies tanh to the already-tanh'd action).
        log_prob = log_prob - jnp.log(1.0 - jnp.square(jnp.tanh(action)) + 1e-07)

        # two separate, single-write outputs (no packed output / wrapper slicing)
        act_ref[...] = action * action_bound
        logp_ref[...] = log_prob

    return policy_kernel


def _choose_batch_tile(B, batch_tile):
    """Sublane-aligned batch tile.

    Prefers (a) >= 2 grid steps whenever B allows, so both TensorCores get work
    on v7x, and (b) a tile that exactly divides B, so no jnp.pad HBM copy is
    needed. Falls back to a padded last tile for awkward batch sizes.
    """
    if B <= 8:
        return B
    half = ((-(-B // 2) + 7) // 8) * 8          # ceil(B/2), rounded up to sublanes
    tile = max(8, min(batch_tile, half))
    tile = (tile // 8) * 8
    t = tile
    while t >= 8:                               # prefer an exact divisor of B
        if B % t == 0:
            return t
        t -= 8
    return tile


def policy_forward(x, eps, params, action_bound, batch_tile=1024):
    """x: [B, state_dim] f32, eps: [B, action_dim] f32 standard-normal noise.

    Returns (action [B, A], log_prob [B, A]) matching the PyTorch Policy.forward.
    """
    B, S = x.shape
    A = eps.shape[1]
    H = params["w1"].shape[1]

    x = x.astype(jnp.float32)
    eps = eps.astype(jnp.float32)

    tile = _choose_batch_tile(B, batch_tile)
    grid_b = pl.cdiv(B, tile)
    padded_B = grid_b * tile
    if padded_B != B:                            # only for awkward batch sizes
        x = jnp.pad(x, ((0, padded_B - B), (0, 0)))
        eps = jnp.pad(eps, ((0, padded_B - B), (0, 0)))

    kernel = make_policy_kernel(float(action_bound), A)

    action, log_prob = pl.pallas_call(
        kernel,
        out_shape=(jax.ShapeDtypeStruct((padded_B, A), jnp.float32),
                   jax.ShapeDtypeStruct((padded_B, A), jnp.float32)),
        grid=(grid_b,),
        in_specs=[
            pl.BlockSpec((tile, S), lambda i: (i, 0)),      # x        (batch-tiled)
            pl.BlockSpec((tile, A), lambda i: (i, 0)),      # eps      (batch-tiled)
            pl.BlockSpec((S, H), lambda i: (0, 0)),         # w1       (VMEM-resident)
            pl.BlockSpec((H, H), lambda i: (0, 0)),         # w2       (VMEM-resident)
            pl.BlockSpec((H, 2 * A), lambda i: (0, 0)),     # w_mu|w_std (resident)
            pl.BlockSpec((1, H), lambda i: (0, 0)),         # b1
            pl.BlockSpec((1, H), lambda i: (0, 0)),         # b2
            pl.BlockSpec((1, 2 * A), lambda i: (0, 0)),     # b_mu|b_std
        ],
        out_specs=(
            pl.BlockSpec((tile, A), lambda i: (i, 0)),      # action
            pl.BlockSpec((tile, A), lambda i: (i, 0)),      # log_prob
        ),
        compiler_params=pltpu.CompilerParams(
            dimension_semantics=("parallel",)),             # 2 TCs on v7x
    )(x, eps, params["w1"], params["w2"], params["w_heads"],
      params["b1"], params["b2"], params["b_heads"])

    if padded_B != B:
        action, log_prob = action[:B], log_prob[:B]
    return action, log_prob


def init_params(key, state_dim, hidden_dim, action_dim, weight_dtype=jnp.float32):
    """PyTorch-style Linear init, pre-transposed to [in, out]; heads pre-fused.

    weight_dtype=jnp.bfloat16 is the recommended fast path on v6e/v7x (the kernel
    accumulates in f32); jnp.float32 keeps exact parity with the PyTorch module.
    """
    ks = jax.random.split(key, 8)

    def lin(kw, kb, fan_in, fan_out):
        bound = 1.0 / math.sqrt(fan_in)
        w = jax.random.uniform(kw, (fan_in, fan_out), jnp.float32, -bound, bound)
        b = jax.random.uniform(kb, (1, fan_out), jnp.float32, -bound, bound)
        return w, b

    w1, b1 = lin(ks[0], ks[1], state_dim, hidden_dim)
    w2, b2 = lin(ks[2], ks[3], hidden_dim, hidden_dim)
    w_mu, b_mu = lin(ks[4], ks[5], hidden_dim, action_dim)
    w_std, b_std = lin(ks[6], ks[7], hidden_dim, action_dim)

    return dict(
        w1=w1.astype(weight_dtype),
        w2=w2.astype(weight_dtype),
        w_heads=jnp.concatenate([w_mu, w_std], axis=1).astype(weight_dtype),
        b1=b1, b2=b2,
        b_heads=jnp.concatenate([b_mu, b_std], axis=1),
    )


def _reference_forward(x, eps, params, action_bound):
    """Pure-JAX mirror of the PyTorch Policy.forward (verification only)."""
    A = params["w_heads"].shape[1] // 2
    hi = jax.lax.Precision.HIGHEST

    h = jnp.maximum(jnp.dot(x, params["w1"].astype(jnp.float32), precision=hi)
                    + params["b1"], 0.0)
    h = jnp.maximum(jnp.dot(h, params["w2"].astype(jnp.float32), precision=hi)
                    + params["b2"], 0.0)
    heads = jnp.dot(h, params["w_heads"].astype(jnp.float32), precision=hi) \
        + params["b_heads"]
    mu, pre_std = heads[:, :A], heads[:, A:]
    std = jax.nn.softplus(pre_std)
    z = mu + std * eps
    action = jnp.tanh(z)
    log_prob = -0.5 * jnp.square((z - mu) / std) - jnp.log(std) - _LOG_SQRT_2PI
    log_prob = log_prob - jnp.log(1.0 - jnp.square(jnp.tanh(action)) + 1e-07)
    return action * action_bound, log_prob


if __name__ == "__main__":
    state_dim, hidden_dim, action_dim = 16, 32, 8
    batch = 64
    action_bound = 2.0

    key = jax.random.PRNGKey(0)
    k_params, k_x, k_eps = jax.random.split(key, 3)

    # f32 weights for exact parity; use weight_dtype=jnp.bfloat16 on v6e/v7x for speed.
    params = init_params(k_params, state_dim, hidden_dim, action_dim)
    x = jax.random.normal(k_x, (batch, state_dim), jnp.float32)
    eps = jax.random.normal(k_eps, (batch, action_dim), jnp.float32)

    # tile selection gives a 2-step batch grid here (exercises the weight-resident
    # pipeline and feeds both TensorCores on v7x).
    fwd = jax.jit(functools.partial(policy_forward, action_bound=action_bound))
    action, log_prob = fwd(x, eps, params)
    jax.block_until_ready((action, log_prob))

    assert action.shape == (batch, action_dim)
    assert log_prob.shape == (batch, action_dim)
    assert bool(jnp.all(jnp.isfinite(action))) and bool(jnp.all(jnp.isfinite(log_prob)))

    ref_action, ref_logp = _reference_forward(x, eps, params, float(action_bound))
    assert bool(jnp.allclose(action, ref_action, atol=1e-3, rtol=1e-3))
    assert bool(jnp.allclose(log_prob, ref_logp, atol=1e-3, rtol=1e-3))
    print("KERNEL_OK")
</pallas_src>

<mosaic_0001>
module attributes {stable_mosaic.version = 11 : i64} {
  func.func @policy_kernel(%arg0: i32, %arg1: memref<32x16xf32, #tpu.memory_space<vmem>>, %arg2: memref<32x8xf32, #tpu.memory_space<vmem>>, %arg3: memref<16x32xf32, #tpu.memory_space<vmem>>, %arg4: memref<32x32xf32, #tpu.memory_space<vmem>>, %arg5: memref<32x16xf32, #tpu.memory_space<vmem>>, %arg6: memref<1x32xf32, #tpu.memory_space<vmem>>, %arg7: memref<1x32xf32, #tpu.memory_space<vmem>>, %arg8: memref<1x16xf32, #tpu.memory_space<vmem>>, %arg9: memref<32x8xf32, #tpu.memory_space<vmem>>, %arg10: memref<32x8xf32, #tpu.memory_space<vmem>>) attributes {dimension_semantics = [#tpu.dimension_semantics<parallel>], iteration_bounds = array<i64: 2>, scalar_prefetch = 0 : i64, scratch_operands = 0 : i64, tpu.core_type = #tpu.core_type<tc>, window_params = [{transform_indices = @transform_0, window_bounds = array<i64: 32, 16>}, {transform_indices = @transform_1, window_bounds = array<i64: 32, 8>}, {pipeline_mode = #tpu.pipeline_mode<synchronous>, transform_indices = @transform_2, window_bounds = array<i64: 16, 32>}, {pipeline_mode = #tpu.pipeline_mode<synchronous>, transform_indices = @transform_3, window_bounds = array<i64: 32, 32>}, {pipeline_mode = #tpu.pipeline_mode<synchronous>, transform_indices = @transform_4, window_bounds = array<i64: 32, 16>}, {pipeline_mode = #tpu.pipeline_mode<synchronous>, transform_indices = @transform_5, window_bounds = array<i64: 1, 32>}, {pipeline_mode = #tpu.pipeline_mode<synchronous>, transform_indices = @transform_6, window_bounds = array<i64: 1, 32>}, {pipeline_mode = #tpu.pipeline_mode<synchronous>, transform_indices = @transform_7, window_bounds = array<i64: 1, 16>}, {transform_indices = @transform_8, window_bounds = array<i64: 32, 8>}, {transform_indices = @transform_9, window_bounds = array<i64: 32, 8>}]} {
    %c0 = arith.constant 0 : index
    %c0_0 = arith.constant 0 : index
    %0 = vector.load %arg1[%c0, %c0_0] : memref<32x16xf32, #tpu.memory_space<vmem>>, vector<32x16xf32>
    %c0_1 = arith.constant 0 : index
    %c0_2 = arith.constant 0 : index
    %1 = vector.load %arg2[%c0_1, %c0_2] : memref<32x8xf32, #tpu.memory_space<vmem>>, vector<32x8xf32>
    %c0_3 = arith.constant 0 : index
    %c0_4 = arith.constant 0 : index
    %2 = vector.load %arg3[%c0_3, %c0_4] : memref<16x32xf32, #tpu.memory_space<vmem>>, vector<16x32xf32>
    %cst = arith.constant dense<0.000000e+00> : vector<32x32xf32>
    %3 = tpu.matmul %0, %2, %cst {dimension_numbers = #tpu.dot_dimension_numbers<[1], [0], [0], [1], [0, 0, 1, 1], [], []>} : vector<32x16xf32>, vector<16x32xf32>, vector<32x32xf32> -> vector<32x32xf32>
    %c0_5 = arith.constant 0 : index
    %c0_6 = arith.constant 0 : index
    %4 = vector.load %arg6[%c0_5, %c0_6] : memref<1x32xf32, #tpu.memory_space<vmem>>, vector<1x32xf32>
    %5 = vector.broadcast %4 : vector<1x32xf32> to vector<32x32xf32>
    %6 = arith.addf %3, %5 : vector<32x32xf32>
    %cst_7 = arith.constant 0.000000e+00 : f32
    %7 = vector.broadcast %cst_7 : f32 to vector<32x32xf32>
    %8 = arith.maximumf %6, %7 : vector<32x32xf32>
    %c0_8 = arith.constant 0 : index
    %c0_9 = arith.constant 0 : index
    %9 = vector.load %arg4[%c0_8, %c0_9] : memref<32x32xf32, #tpu.memory_space<vmem>>, vector<32x32xf32>
    %cst_10 = arith.constant dense<0.000000e+00> : vector<32x32xf32>
    %10 = tpu.matmul %8, %9, %cst_10 {dimension_numbers = #tpu.dot_dimension_numbers<[1], [0], [0], [1], [0, 0, 1, 1], [], []>} : vector<32x32xf32>, vector<32x32xf32>, vector<32x32xf32> -> vector<32x32xf32>
    %c0_11 = arith.constant 0 : index
    %c0_12 = arith.constant 0 : index
    %11 = vector.load %arg7[%c0_11, %c0_12] : memref<1x32xf32, #tpu.memory_space<vmem>>, vector<1x32xf32>
    %12 = vector.broadcast %11 : vector<1x32xf32> to vector<32x32xf32>
    %13 = arith.addf %10, %12 : vector<32x32xf32>
    %cst_13 = arith.constant 0.000000e+00 : f32
    %14 = vector.broadcast %cst_13 : f32 to vector<32x32xf32>
    %15 = arith.maximumf %13, %14 : vector<32x32xf32>
    %c0_14 = arith.constant 0 : index
    %c0_15 = arith.constant 0 : index
    %16 = vector.load %arg5[%c0_14, %c0_15] : memref<32x16xf32, #tpu.memory_space<vmem>>, vector<32x16xf32>
    %cst_16 = arith.constant dense<0.000000e+00> : vector<32x16xf32>
    %17 = tpu.matmul %15, %16, %cst_16 {dimension_numbers = #tpu.dot_dimension_numbers<[1], [0], [0], [1], [0, 0, 1, 1], [], []>} : vector<32x32xf32>, vector<32x16xf32>, vector<32x16xf32> -> vector<32x16xf32>
    %c0_17 = arith.constant 0 : index
    %c0_18 = arith.constant 0 : index
    %18 = vector.load %arg8[%c0_17, %c0_18] : memref<1x16xf32, #tpu.memory_space<vmem>>, vector<1x16xf32>
    %19 = vector.broadcast %18 : vector<1x16xf32> to vector<32x16xf32>
    %20 = arith.addf %17, %19 : vector<32x16xf32>
    %21 = vector.extract_strided_slice %20 {offsets = [0, 0], sizes = [32, 8], strides = [1, 1]} : vector<32x16xf32> to vector<32x8xf32>
    %22 = vector.extract_strided_slice %20 {offsets = [0, 8], sizes = [32, 8], strides = [1, 1]} : vector<32x16xf32> to vector<32x8xf32>
    %cst_19 = arith.constant 0.000000e+00 : f32
    %23 = vector.broadcast %cst_19 : f32 to vector<32x8xf32>
    %24 = arith.maximumf %22, %23 : vector<32x8xf32>
    %25 = math.absf %22 : vector<32x8xf32>
    %cst_20 = arith.constant 0.000000e+00 : f32
    %26 = vector.broadcast %cst_20 : f32 to vector<32x8xf32>
    %27 = arith.subf %26, %25 : vector<32x8xf32>
    %28 = math.exp %27 : vector<32x8xf32>
    %29 = math.log1p %28 : vector<32x8xf32>
    %30 = arith.addf %24, %29 : vector<32x8xf32>
    %31 = arith.mulf %30, %1 : vector<32x8xf32>
    %32 = arith.addf %21, %31 : vector<32x8xf32>
    %33 = math.tanh %32 : vector<32x8xf32>
    %34 = arith.mulf %1, %1 : vector<32x8xf32>
    %cst_21 = arith.constant -5.000000e-01 : f32
    %35 = vector.broadcast %cst_21 : f32 to vector<32x8xf32>
    %36 = arith.mulf %35, %34 : vector<32x8xf32>
    %37 = math.log %30 : vector<32x8xf32>
    %38 = arith.subf %36, %37 : vector<32x8xf32>
    %cst_22 = arith.constant 0.918938517 : f32
    %39 = vector.broadcast %cst_22 : f32 to vector<32x8xf32>
    %40 = arith.subf %38, %39 : vector<32x8xf32>
    %41 = math.tanh %33 : vector<32x8xf32>
    %42 = arith.mulf %41, %41 : vector<32x8xf32>
    %cst_23 = arith.constant 1.000000e+00 : f32
    %43 = vector.broadcast %cst_23 : f32 to vector<32x8xf32>
    %44 = arith.subf %43, %42 : vector<32x8xf32>
    %cst_24 = arith.constant 1.000000e-07 : f32
    %45 = vector.broadcast %cst_24 : f32 to vector<32x8xf32>
    %46 = arith.addf %44, %45 : vector<32x8xf32>
    %47 = math.log %46 : vector<32x8xf32>
    %48 = arith.subf %40, %47 : vector<32x8xf32>
    %cst_25 = arith.constant 2.000000e+00 : f32
    %49 = vector.broadcast %cst_25 : f32 to vector<32x8xf32>
    %50 = arith.mulf %33, %49 : vector<32x8xf32>
    %c0_26 = arith.constant 0 : index
    %c0_27 = arith.constant 0 : index
    %51 = vector.load %arg9[%c0_26, %c0_27] : memref<32x8xf32, #tpu.memory_space<vmem>>, vector<32x8xf32>
    tpu.vector_store %arg9[%c0_26, %c0_27], %50 {strides = array<i32>} : memref<32x8xf32, #tpu.memory_space<vmem>>, vector<32x8xf32>,
    %c0_28 = arith.constant 0 : index
    %c0_29 = arith.constant 0 : index
    %52 = vector.load %arg10[%c0_28, %c0_29] : memref<32x8xf32, #tpu.memory_space<vmem>>, vector<32x8xf32>
    tpu.vector_store %arg10[%c0_28, %c0_29], %48 {strides = array<i32>} : memref<32x8xf32, #tpu.memory_space<vmem>>, vector<32x8xf32>,
    return
  }
  func.func @transform_0(%arg0: i32) -> (i32, i32) {
    %c0_i32 = arith.constant 0 : i32
    %c0_i32_0 = arith.constant 0 : i32
    return %arg0, %c0_i32 : i32, i32
  }
  func.func @transform_1(%arg0: i32) -> (i32, i32) {
    %c0_i32 = arith.constant 0 : i32
    %c0_i32_0 = arith.constant 0 : i32
    return %arg0, %c0_i32 : i32, i32
  }
  func.func @transform_2(%arg0: i32) -> (i32, i32) {
    %c0_i32 = arith.constant 0 : i32
    %c0_i32_0 = arith.constant 0 : i32
    %c0_i32_1 = arith.constant 0 : i32
    return %c0_i32, %c0_i32_0 : i32, i32
  }
  func.func @transform_3(%arg0: i32) -> (i32, i32) {
    %c0_i32 = arith.constant 0 : i32
    %c0_i32_0 = arith.constant 0 : i32
    %c0_i32_1 = arith.constant 0 : i32
    return %c0_i32, %c0_i32_0 : i32, i32
  }
  func.func @transform_4(%arg0: i32) -> (i32, i32) {
    %c0_i32 = arith.constant 0 : i32
    %c0_i32_0 = arith.constant 0 : i32
    %c0_i32_1 = arith.constant 0 : i32
    return %c0_i32, %c0_i32_0 : i32, i32
  }
  func.func @transform_5(%arg0: i32) -> (i32, i32) {
    %c0_i32 = arith.constant 0 : i32
    %c0_i32_0 = arith.constant 0 : i32
    %c0_i32_1 = arith.constant 0 : i32
    return %c0_i32, %c0_i32_0 : i32, i32
  }
  func.func @transform_6(%arg0: i32) -> (i32, i32) {
    %c0_i32 = arith.constant 0 : i32
    %c0_i32_0 = arith.constant 0 : i32
    %c0_i32_1 = arith.constant 0 : i32
    return %c0_i32, %c0_i32_0 : i32, i32
  }
  func.func @transform_7(%arg0: i32) -> (i32, i32) {
    %c0_i32 = arith.constant 0 : i32
    %c0_i32_0 = arith.constant 0 : i32
    %c0_i32_1 = arith.constant 0 : i32
    return %c0_i32, %c0_i32_0 : i32, i32
  }
  func.func @transform_8(%arg0: i32) -> (i32, i32) {
    %c0_i32 = arith.constant 0 : i32
    %c0_i32_0 = arith.constant 0 : i32
    return %arg0, %c0_i32 : i32, i32
  }
  func.func @transform_9(%arg0: i32) -> (i32, i32) {
    %c0_i32 = arith.constant 0 : i32
    %c0_i32_0 = arith.constant 0 : i32
    return %arg0, %c0_i32 : i32, i32
  }
}

</mosaic_0001>

<llo_original>
// kernel: policy_forward.1
$region0: #{policy_forward.1}
  #allocation0 [shape = 'u32[]', space=smem, size = 0x4, offset = 0x4, fixed_abs, tag = 'smem constant byte address 0x4 - core index']
  #allocation1 [shape = 'u32[72,128]{1,0:T(1,128)}', space=vmem, size = 0x9000, scoped, tag = 'internal scratch']
  %s0 = inlined_call_operand.vmem [shape: f32[64,16], index: 0, kind: input, shape index: {}]
  %s1 = inlined_call_operand.vmem [shape: f32[64,8], index: 1, kind: input, shape index: {}]
  %s2 = inlined_call_operand.vmem [shape: f32[16,32], index: 2, kind: input, shape index: {}]
  %s3 = inlined_call_operand.vmem [shape: f32[32,32], index: 3, kind: input, shape index: {}]
  %s4 = inlined_call_operand.vmem [shape: f32[32,16], index: 4, kind: input, shape index: {}]
  %s5 = inlined_call_operand.vmem [shape: f32[1,32], index: 5, kind: input, shape index: {}]
  %s6 = inlined_call_operand.vmem [shape: f32[1,32], index: 6, kind: input, shape index: {}]
  %s7 = inlined_call_operand.vmem [shape: f32[1,16], index: 7, kind: input, shape index: {}]
  %s8 = inlined_call_operand.vmem [shape: f32[64,8], index: 8, kind: output, shape index: {0}]
  %s9 = inlined_call_operand.vmem [shape: f32[64,8], index: 9, kind: output, shape index: {1}]
  %10 = xla_tuple %s8, %s9
  %s11 = sld [smem:[#allocation0]]
  $region73: #{policy_forward.1} parent=0
    _
  %s13 = ssub.s32 1, %s11
  %s14 = scalar_select 0, %s13, %s11
  loop: start=0, step=1, limit=4
  $region2: #{policy_forward.1} parent=0 // loop_pre_header
    _
  $region3: #{policy_forward.1} parent=0 // loop_header
    %s16 = sphi 0, %s20
    %p17 = scmp.ge.s32.totalorder %s16, 4
    %s26 = sphi 0, %s28
    %s29 = sphi 0, %s26
    %s30 = sphi 0, %s29
    %s46 = sphi 0, %s30
    %s52 = sphi 0, %s54
    %s55 = sphi 0, %s52
    %s56 = sphi 0, %s55
    %s72 = sphi 0, %s56
    %s76 = sphi 0, %s76
    %s78 = sphi 0, %s76
    %s79 = sphi 0, %s78
    %s93 = sphi 0, %s79
    %s97 = sphi 0, %s97
    %s99 = sphi 0, %s97
    %s100 = sphi 0, %s99
    %s114 = sphi 0, %s100
    %s118 = sphi 0, %s118
    %s120 = sphi 0, %s118
    %s121 = sphi 0, %s120
    %s135 = sphi 0, %s121
    %s139 = sphi 0, %s139
    %s141 = sphi 0, %s139
    %s142 = sphi 0, %s141
    %s156 = sphi 0, %s142
    %s160 = sphi 0, %s160
    %s162 = sphi 0, %s160
    %s163 = sphi 0, %s162
    %s177 = sphi 0, %s163
    %s181 = sphi 0, %s181
    %s183 = sphi 0, %s181
    %s184 = sphi 0, %s183
    %s198 = sphi 0, %s184
    %s204 = sphi 0, %s206
    %s207 = sphi 0, %s204
    %s208 = sphi 0, %s207
    %s224 = sphi 0, %s208
    %s230 = sphi 0, %s232
    %s233 = sphi 0, %s230
    %s234 = sphi 0, %s233
    %s250 = sphi 0, %s234
  $region4: #{policy_forward.1} parent=0 // loop_header_branch
    %19 = sbr.rel (%p17) target = $region8
  $region5: #{policy_forward.1} parent=0 // loop_body
    %s21 = ssub.s32 %s16, 1
    %s22 = ssub.s32 %s16, 2
    %s23 = sadd.s32 %s16, 1
    %s24 = ssub.s32 %s16, %s23
    %p25 = scmp.eq.s32.totalorder %s24, 0
    %s27 = sadd.s32 %s26, 1
    %s28 = scalar_select %p25, %s26, %s27
    %p31 = pneg %p25
    %p32 = scmp.eq.s32.totalorder %s16, 1
    %p33 = por %p31, %p32
    %p34 = scmp.ne.s32.totalorder %s26, %s29
    %p35 = scmp.eq.s32.totalorder %s16, 0
    %p36 = por %p34, %p35
    %p37 = scmp.ne.s32.totalorder %s26, %s29
    %p38 = scmp.eq.s32.totalorder %s21, 1
    %p39 = por %p37, %p38
    %p40 = scmp.ne.s32.totalorder %s29, %s30
    %p41 = scmp.eq.s32.totalorder %s21, 0
    %p42 = por %p40, %p41
    %p43 = scmp.ne.s32.totalorder %s29, %s30
    %p44 = scmp.eq.s32.totalorder %s22, 1
    %p45 = por %p43, %p44
    %p47 = scmp.ne.s32.totalorder %s30, %s46
    %p48 = scmp.eq.s32.totalorder %s22, 0
    %p49 = por %p47, %p48
    %s50 = ssub.s32 %s16, %s23
    %p51 = scmp.eq.s32.totalorder %s50, 0
    %s53 = sadd.s32 %s52, 1
    %s54 = scalar_select %p51, %s52, %s53
    %p57 = pneg %p51
    %p58 = scmp.eq.s32.totalorder %s16, 1
    %p59 = por %p57, %p58
    %p60 = scmp.ne.s32.totalorder %s52, %s55
    %p61 = scmp.eq.s32.totalorder %s16, 0
    %p62 = por %p60, %p61
    %p63 = scmp.ne.s32.totalorder %s52, %s55
    %p64 = scmp.eq.s32.totalorder %s21, 1
    %p65 = por %p63, %p64
    %p66 = scmp.ne.s32.totalorder %s55, %s56
    %p67 = scmp.eq.s32.totalorder %s21, 0
    %p68 = por %p66, %p67
    %p69 = scmp.ne.s32.totalorder %s55, %s56
    %p70 = scmp.eq.s32.totalorder %s22, 1
    %p71 = por %p69, %p70
    %p73 = scmp.ne.s32.totalorder %s56, %s72
    %p74 = scmp.eq.s32.totalorder %s22, 0
    %p75 = por %p73, %p74
    %s77 = sadd.s32 %s76, 1
    %p80 = scmp.eq.s32.totalorder %s16, 1
    %p81 = scmp.ne.s32.totalorder %s76, %s78
    %p82 = scmp.eq.s32.totalorder %s16, 0
    %p83 = por %p81, %p82
    %p84 = scmp.ne.s32.totalorder %s76, %s78
    %p85 = scmp.eq.s32.totalorder %s21, 1
    %p86 = por %p84, %p85
    %p87 = scmp.ne.s32.totalorder %s78, %s79
    %p88 = scmp.eq.s32.totalorder %s21, 0
    %p89 = por %p87, %p88
    %p90 = scmp.ne.s32.totalorder %s78, %s79
    %p91 = scmp.eq.s32.totalorder %s22, 1
    %p92 = por %p90, %p91
    %p94 = scmp.ne.s32.totalorder %s79, %s93
    %p95 = scmp.eq.s32.totalorder %s22, 0
    %p96 = por %p94, %p95
    %s98 = sadd.s32 %s97, 1
    %p101 = scmp.eq.s32.totalorder %s16, 1
    %p102 = scmp.ne.s32.totalorder %s97, %s99
    %p103 = scmp.eq.s32.totalorder %s16, 0
    %p104 = por %p102, %p103
    %p105 = scmp.ne.s32.totalorder %s97, %s99
    %p106 = scmp.eq.s32.totalorder %s21, 1
    %p107 = por %p105, %p106
    %p108 = scmp.ne.s32.totalorder %s99, %s100
    %p109 = scmp.eq.s32.totalorder %s21, 0
    %p110 = por %p108, %p109
    %p111 = scmp.ne.s32.totalorder %s99, %s100
    %p112 = scmp.eq.s32.totalorder %s22, 1
    %p113 = por %p111, %p112
    %p115 = scmp.ne.s32.totalorder %s100, %s114
    %p116 = scmp.eq.s32.totalorder %s22, 0
    %p117 = por %p115, %p116
    %s119 = sadd.s32 %s118, 1
    %p122 = scmp.eq.s32.totalorder %s16, 1
    %p123 = scmp.ne.s32.totalorder %s118, %s120
    %p124 = scmp.eq.s32.totalorder %s16, 0
    %p125 = por %p123, %p124
    %p126 = scmp.ne.s32.totalorder %s118, %s120
    %p127 = scmp.eq.s32.totalorder %s21, 1
    %p128 = por %p126, %p127
    %p129 = scmp.ne.s32.totalorder %s120, %s121
    %p130 = scmp.eq.s32.totalorder %s21, 0
    %p131 = por %p129, %p130
    %p132 = scmp.ne.s32.totalorder %s120, %s121
    %p133 = scmp.eq.s32.totalorder %s22, 1
    %p134 = por %p132, %p133
    %p136 = scmp.ne.s32.totalorder %s121, %s135
    %p137 = scmp.eq.s32.totalorder %s22, 0
    %p138 = por %p136, %p137
    %s140 = sadd.s32 %s139, 1
    %p143 = scmp.eq.s32.totalorder %s16, 1
    %p144 = scmp.ne.s32.totalorder %s139, %s141
    %p145 = scmp.eq.s32.totalorder %s16, 0
    %p146 = por %p144, %p145
    %p147 = scmp.ne.s32.totalorder %s139, %s141
    %p148 = scmp.eq.s32.totalorder %s21, 1
    %p149 = por %p147, %p148
    %p150 = scmp.ne.s32.totalorder %s141, %s142
    %p151 = scmp.eq.s32.totalorder %s21, 0
    %p152 = por %p150, %p151
    %p153 = scmp.ne.s32.totalorder %s141, %s142
    %p154 = scmp.eq.s32.totalorder %s22, 1
    %p155 = por %p153, %p154
    %p157 = scmp.ne.s32.totalorder %s142, %s156
    %p158 = scmp.eq.s32.totalorder %s22, 0
    %p159 = por %p157, %p158
    %s161 = sadd.s32 %s160, 1
    %p164 = scmp.eq.s32.totalorder %s16, 1
    %p165 = scmp.ne.s32.totalorder %s160, %s162
    %p166 = scmp.eq.s32.totalorder %s16, 0
    %p167 = por %p165, %p166
    %p168 = scmp.ne.s32.totalorder %s160, %s162
    %p169 = scmp.eq.s32.totalorder %s21, 1
    %p170 = por %p168, %p169
    %p171 = scmp.ne.s32.totalorder %s162, %s163
    %p172 = scmp.eq.s32.totalorder %s21, 0
    %p173 = por %p171, %p172
    %p174 = scmp.ne.s32.totalorder %s162, %s163
    %p175 = scmp.eq.s32.totalorder %s22, 1
    %p176 = por %p174, %p175
    %p178 = scmp.ne.s32.totalorder %s163, %s177
    %p179 = scmp.eq.s32.totalorder %s22, 0
    %p180 = por %p178, %p179
    %s182 = sadd.s32 %s181, 1
    %p185 = scmp.eq.s32.totalorder %s16, 1
    %p186 = scmp.ne.s32.totalorder %s181, %s183
    %p187 = scmp.eq.s32.totalorder %s16, 0
    %p188 = por %p186, %p187
    %p189 = scmp.ne.s32.totalorder %s181, %s183
    %p190 = scmp.eq.s32.totalorder %s21, 1
    %p191 = por %p189, %p190
    %p192 = scmp.ne.s32.totalorder %s183, %s184
    %p193 = scmp.eq.s32.totalorder %s21, 0
    %p194 = por %p192, %p193
    %p195 = scmp.ne.s32.totalorder %s183, %s184
    %p196 = scmp.eq.s32.totalorder %s22, 1
    %p197 = por %p195, %p196
    %p199 = scmp.ne.s32.totalorder %s184, %s198
    %p200 = scmp.eq.s32.totalorder %s22, 0
    %p201 = por %p199, %p200
    %s202 = ssub.s32 %s16, %s23
    %p203 = scmp.eq.s32.totalorder %s202, 0
    %s205 = sadd.s32 %s204, 1
    %s206 = scalar_select %p203, %s204, %s205
    %p209 = pneg %p203
    %p210 = scmp.eq.s32.totalorder %s16, 1
    %p211 = por %p209, %p210
    %p212 = scmp.ne.s32.totalorder %s204, %s207
    %p213 = scmp.eq.s32.totalorder %s16, 0
    %p214 = por %p212, %p213
    %p215 = scmp.ne.s32.totalorder %s204, %s207
    %p216 = scmp.eq.s32.totalorder %s21, 1
    %p217 = por %p215, %p216
    %p218 = scmp.ne.s32.totalorder %s207, %s208
    %p219 = scmp.eq.s32.totalorder %s21, 0
    %p220 = por %p218, %p219
    %p221 = scmp.ne.s32.totalorder %s207, %s208
    %p222 = scmp.eq.s32.totalorder %s22, 1
    %p223 = por %p221, %p222
    %p225 = scmp.ne.s32.totalorder %s208, %s224
    %p226 = scmp.eq.s32.totalorder %s22, 0
    %p227 = por %p225, %p226
    %s228 = ssub.s32 %s16, %s23
    %p229 = scmp.eq.s32.totalorder %s228, 0
    %s231 = sadd.s32 %s230, 1
    %s232 = scalar_select %p229, %s230, %s231
    %p235 = pneg %p229
    %p236 = scmp.eq.s32.totalorder %s16, 1
    %p237 = por %p235, %p236
    %p238 = scmp.ne.s32.totalorder %s230, %s233
    %p239 = scmp.eq.s32.totalorder %s16, 0
    %p240 = por %p238, %p239
    %p241 = scmp.ne.s32.totalorder %s230, %s233
    %p242 = scmp.eq.s32.totalorder %s21, 1
    %p243 = por %p241, %p242
    %p244 = scmp.ne.s32.totalorder %s233, %s234
    %p245 = scmp.eq.s32.totalorder %s21, 0
    %p246 = por %p244, %p245
    %p247 = scmp.ne.s32.totalorder %s233, %s234
    %p248 = scmp.eq.s32.totalorder %s22, 1
    %p249 = por %p247, %p248
    %p251 = scmp.ne.s32.totalorder %s234, %s250
    %p252 = scmp.eq.s32.totalorder %s22, 0
    %p253 = por %p251, %p252
    %p254 = scmp.le.s32.totalorder 1, %s16
    %p255 = scmp.lt.s32.totalorder %s16, 3
    %p256 = pnand %p254, %p255
    %p257 = pneg %p256
    // Predicated region
    $region9: #{policy_forward.1} parent=5 // pred_check
      _
    $region10: #{policy_forward.1} parent=5 // pred_check_branch
      %259 = sbr.rel (%p256) target = $region12
    $region11: #{policy_forward.1} parent=5 // pred_region
      %s260 = ssub.s32 %s16, 1
      // Predicated region
      $region13: #{policy_forward.1} parent=11 // pred_check
        %p261 = pneg %p89
      $region14: #{policy_forward.1} parent=11 // pred_check_branch
        %263 = sbr.rel (%p261) target = $region16
      $region15: #{policy_forward.1} parent=11 // pred_region
        _
      $region16: #{policy_forward.1} parent=11 // pred_fallthru
        _
      // Predicated region
      $region17: #{policy_forward.1} parent=11 // pred_check
        %p264 = pneg %p110
      $region18: #{policy_forward.1} parent=11 // pred_check_branch
        %266 = sbr.rel (%p264) target = $region20
      $region19: #{policy_forward.1} parent=11 // pred_region
        _
      $region20: #{policy_forward.1} parent=11 // pred_fallthru
        _
      // Predicated region
      $region21: #{policy_forward.1} parent=11 // pred_check
        %p267 = pneg %p131
      $region22: #{policy_forward.1} parent=11 // pred_check_branch
        %269 = sbr.rel (%p267) target = $region24
      $region23: #{policy_forward.1} parent=11 // pred_region
        _
      $region24: #{policy_forward.1} parent=11 // pred_fallthru
        _
      // Predicated region
      $region25: #{policy_forward.1} parent=11 // pred_check
        %p270 = pneg %p152
      $region26: #{policy_forward.1} parent=11 // pred_check_branch
        %272 = sbr.rel (%p270) target = $region28
      $region27: #{policy_forward.1} parent=11 // pred_region
        _
      $region28: #{policy_forward.1} parent=11 // pred_fallthru
        _
      // Predicated region
      $region29: #{policy_forward.1} parent=11 // pred_check
        %p273 = pneg %p173
      $region30: #{policy_forward.1} parent=11 // pred_check_branch
        %275 = sbr.rel (%p273) target = $region32
      $region31: #{policy_forward.1} parent=11 // pred_region
        _
      $region32: #{policy_forward.1} parent=11 // pred_fallthru
        _
      // Predicated region
      $region33: #{policy_forward.1} parent=11 // pred_check
        %p276 = pneg %p194
      $region34: #{policy_forward.1} parent=11 // pred_check_branch
        %278 = sbr.rel (%p276) target = $region36
      $region35: #{policy_forward.1} parent=11 // pred_region
        _
      $region36: #{policy_forward.1} parent=11 // pred_fallthru
        _
    $region12: #{policy_forward.1} parent=5 // pred_fallthru
      _
    %p279 = scmp.lt.s32.totalorder %s16, 2
    // Predicated region
    $region37: #{policy_forward.1} parent=5 // pred_check
      %p280 = pneg %p279
    $region38: #{policy_forward.1} parent=5 // pred_check_branch
      %282 = sbr.rel (%p280) target = $region40
    $region39: #{policy_forward.1} parent=5 // pred_region
      // Predicated region
      $region41: #{policy_forward.1} parent=39 // pred_check
        %p283 = pneg %p36
      $region42: #{policy_forward.1} parent=39 // pred_check_branch
        %285 = sbr.rel (%p283) target = $region44
      $region43: #{policy_forward.1} parent=39 // pred_region
        %s286 = smul.u32 4, %s16
        %p287 = scmp.lt.s32.totalorder %s286, 7
        %s288 = scalar_select %p287, %s286, 7
        %s289 = smul.addr %s288, 8
        %s290 = scalar_lea.vmem %s0, %s289
        %s291 = smul.u32 4, %s16
      $region44: #{policy_forward.1} parent=39 // pred_fallthru
        _
      // Predicated region
      $region45: #{policy_forward.1} parent=39 // pred_check
        %p292 = pneg %p62
      $region46: #{policy_forward.1} parent=39 // pred_check_branch
        %294 = sbr.rel (%p292) target = $region48
      $region47: #{policy_forward.1} parent=39 // pred_region
        %s295 = smul.u32 4, %s16
        %p296 = scmp.lt.s32.totalorder %s295, 7
        %s297 = scalar_select %p296, %s295, 7
        %s298 = smul.addr %s297, 8
        %s299 = scalar_lea.vmem %s1, %s298
        %s300 = smul.u32 4, %s16
      $region48: #{policy_forward.1} parent=39 // pred_fallthru
        _
    $region40: #{policy_forward.1} parent=5 // pred_fallthru
      _
    %p301 = scmp.le.s32.totalorder 1, %s16
    %p302 = scmp.lt.s32.totalorder %s16, 3
    %p303 = pnand %p301, %p302
    %p304 = pneg %p303
    // Predicated region
    $region49: #{policy_forward.1} parent=5 // pred_check
      _
    $region50: #{policy_forward.1} parent=5 // pred_check_branch
      %306 = sbr.rel (%p303) target = $region52
    $region51: #{policy_forward.1} parent=5 // pred_region
      %s307 = ssub.s32 %s16, 1
      %s308 = smul.u32 4, %s21
      %p309 = scmp.lt.s32.totalorder %s308, 7
      %s310 = scalar_select %p309, %s308, 7
      %s311 = smul.addr %s310, 8
      %s312 = scalar_lea.vmem %s0, %s311
      %p313 = pneg %p42
      %p314 = pneg %p39
      %s315 = smul.u32 4, %s21
      %p316 = scmp.lt.s32.totalorder %s315, 7
      %s317 = scalar_select %p316, %s315, 7
      %s318 = smul.addr %s317, 8
      %s319 = scalar_lea.vmem %s1, %s318
      %p320 = pneg %p68
      %p321 = pneg %p65
      %p322 = pneg %p89
      %p323 = pneg %p86
      %p324 = pneg %p110
      %p325 = pneg %p107
      %p326 = pneg %p131
      %p327 = pneg %p128
      %p328 = pneg %p152
      %p329 = pneg %p149
      %p330 = pneg %p173
      %p331 = pneg %p170
      %p332 = pneg %p194
      %p333 = pneg %p191
      %p334 = pneg %p220
      %p335 = pneg %p217
      %s336 = smul.u32 4, %s21
      %p337 = scmp.lt.s32.totalorder %s336, 7
      %s338 = scalar_select %p337, %s336, 7
      %s339 = smul.addr %s338, 8
      %s340 = scalar_lea.vmem %s8, %s339
      %p341 = pneg %p246
      %p342 = pneg %p243
      %s343 = smul.u32 4, %s21
      %p344 = scmp.lt.s32.totalorder %s343, 7
      %s345 = scalar_select %p344, %s343, 7
      %s346 = smul.addr %s345, 8
      %s347 = scalar_lea.vmem %s9, %s346
      %s348 = smul.u32 4, %s21
      %p349 = scmp.lt.s32.totalorder %s348, 7
      %s350 = scalar_select %p349, %s348, 7
      %s351 = smul.addr %s350, 8
      %s352 = scalar_lea.vmem %s0, %s351
      %s353 = smul.u32 4, %s21
      %s354 = smul.u32 4, %s21
      %p355 = scmp.lt.s32.totalorder %s354, 7
      %s356 = scalar_select %p355, %s354, 7
      %s357 = smul.addr %s356, 8
      %s358 = scalar_lea.vmem %s1, %s357
      %s359 = smul.u32 4, %s21
      %s360 = smul.u32 4, %s21
      %p361 = scmp.lt.s32.totalorder %s360, 7
      %s362 = scalar_select %p361, %s360, 7
      %s363 = smul.addr %s362, 8
      %s364 = scalar_lea.vmem %s8, %s363
      %s365 = smul.u32 4, %s21
      %s366 = smul.u32 4, %s21
      %p367 = scmp.lt.s32.totalorder %s366, 7
      %s368 = scalar_select %p367, %s366, 7
      %s369 = smul.addr %s368, 8
      %s370 = scalar_lea.vmem %s9, %s369
      %s371 = smul.u32 4, %s21
      %v372 = vld [vmem:[%s352] sm:$0xff]
      %v373 = vld [vmem:[%s352 + $0x8] sm:$0xff]
      %v374 = vld [vmem:[%s352 + $0x10] sm:$0xff]
      %v375 = vld [vmem:[%s352 + $0x18] sm:$0xff]
      %v376 = vld [vmem:[%s358] sm:$0xff]
      %v377 = vld [vmem:[%s358 + $0x8] sm:$0xff]
      %v378 = vld [vmem:[%s358 + $0x10] sm:$0xff]
      %v379 = vld [vmem:[%s358 + $0x18] sm:$0xff]
      %v380 = vld [vmem:[%s2] sm:$0xff]
      %v381 = vld [vmem:[%s2 + $0x8] sm:$0xff]
      %v382 = vld [vmem:[%s5] sm:$0x1]
      %v384 = vperm.slane %v382, 0
      %vm386 = vcmask 130048
      %v388 = vsel %vm386, %v372, 0
      %v391 = vsel %vm386, %v373, 0
      %v394 = vsel %vm386, %v374, 0
      %v397 = vsel %vm386, %v375, 0
      %399 = vmatpush.msra.mxu0 0.0
      %400 = vmatpush.msra.mxu0 0.0
      %401 = vmatpush.msra.mxu0 0.0
      %402 = vmatpush.msra.mxu0 0.0
      %403 = vmatpush.msra.mxu0 0.0
      %404 = vmatpush.msra.mxu0 0.0
      %405 = vmatpush.msra.mxu0 0.0
      %406 = vmatpush.msra.mxu0 0.0
      %407 = vmatpush.msra.mxu0 0.0
      %408 = vmatpush.msra.mxu0 0.0
      %409 = vmatpush.msra.mxu0 0.0
      %410 = vmatpush.msra.mxu0 0.0
      %411 = vmatpush.msra.mxu0 0.0
      %412 = vmatpush.msra.mxu0 0.0
      %413 = vmatpush.msra.mxu0 %v381
      %414 = vmatpush.msra.mxu0 %v380
      %415 = vmatmul.f32.gmra.mxu0 %v388
      %v416 = vpop.f32.mrf.mxu0
      %v417 = vadd.f32 %v384, %v416
      %418 = vmatmul.f32.gmra.mxu0 %v391
      %v419 = vpop.f32.mrf.mxu0
      %v420 = vadd.f32 %v384, %v419
      %421 = vmatmul.f32.gmra.mxu0 %v394
      %v422 = vpop.f32.mrf.mxu0
      %v423 = vadd.f32 %v384, %v422
      %424 = vmatmul.f32.gmra.mxu0 %v397
      %v425 = vpop.f32.mrf.mxu0
      %v426 = vadd.f32 %v384, %v425
      %427 = vdwg.mxu0
      %v428 = vmax.f32 %v417, 0.0
      %v429 = vmax.f32 %v420, 0.0
      %v430 = vmax.f32 %v423, 0.0
      %v431 = vmax.f32 %v426, 0.0
      %v432 = vld [vmem:[%s3] sm:$0xff]
      %v433 = vld [vmem:[%s3 + $0x8] sm:$0xff]
      %v434 = vld [vmem:[%s3 + $0x10] sm:$0xff]
      %v435 = vld [vmem:[%s3 + $0x18] sm:$0xff]
      %v436 = vld [vmem:[%s6] sm:$0x1]
      %v438 = vperm.slane %v436, 0
      %vm440 = vcmask 261120
      %v442 = vsel %vm440, %v428, 0
      %v445 = vsel %vm440, %v429, 0
      %v448 = vsel %vm440, %v430, 0
      %v451 = vsel %vm440, %v431, 0
      %453 = vmatpush.msra.mxu0 0.0
      %454 = vmatpush.msra.mxu0 0.0
      %455 = vmatpush.msra.mxu0 0.0
      %456 = vmatpush.msra.mxu0 0.0
      %457 = vmatpush.msra.mxu0 0.0
      %458 = vmatpush.msra.mxu0 0.0
      %459 = vmatpush.msra.mxu0 0.0
      %460 = vmatpush.msra.mxu0 0.0
      %461 = vmatpush.msra.mxu0 0.0
      %462 = vmatpush.msra.mxu0 0.0
      %463 = vmatpush.msra.mxu0 0.0
      %464 = vmatpush.msra.mxu0 0.0
      %465 = vmatpush.msra.mxu0 %v435
      %466 = vmatpush.msra.mxu0 %v434
      %467 = vmatpush.msra.mxu0 %v433
      %468 = vmatpush.msra.mxu0 %v432
      %469 = vmatmul.f32.gmra.mxu0 %v442
      %v470 = vpop.f32.mrf.mxu0
      %v471 = vadd.f32 %v438, %v470
      %472 = vmatmul.f32.gmra.mxu0 %v445
      %v473 = vpop.f32.mrf.mxu0
      %v474 = vadd.f32 %v438, %v473
      %475 = vmatmul.f32.gmra.mxu0 %v448
      %v476 = vpop.f32.mrf.mxu0
      %v477 = vadd.f32 %v438, %v476
      %478 = vmatmul.f32.gmra.mxu0 %v451
      %v479 = vpop.f32.mrf.mxu0
      %v480 = vadd.f32 %v438, %v479
      %481 = vdwg.mxu0
      %v482 = vmax.f32 %v471, 0.0
      %v483 = vmax.f32 %v474, 0.0
      %v484 = vmax.f32 %v477, 0.0
      %v485 = vmax.f32 %v480, 0.0
      %v486 = vld [vmem:[%s4] sm:$0xff]
      %v487 = vld [vmem:[%s4 + $0x8] sm:$0xff]
      %v488 = vld [vmem:[%s4 + $0x10] sm:$0xff]
      %v489 = vld [vmem:[%s4 + $0x18] sm:$0xff]
      %v490 = vld [vmem:[%s7] sm:$0x1]
      %v492 = vperm.slane %v490, 0
      %v495 = vsel %vm440, %v482, 0
      %v498 = vsel %vm440, %v483, 0
      %v501 = vsel %vm440, %v484, 0
      %v504 = vsel %vm440, %v485, 0
      %506 = vmatpush.msra.mxu0 0.0
      %507 = vmatpush.msra.mxu0 0.0
      %508 = vmatpush.msra.mxu0 0.0
      %509 = vmatpush.msra.mxu0 0.0
      %510 = vmatpush.msra.mxu0 0.0
      %511 = vmatpush.msra.mxu0 0.0
      %512 = vmatpush.msra.mxu0 0.0
      %513 = vmatpush.msra.mxu0 0.0
      %514 = vmatpush.msra.mxu0 0.0
      %515 = vmatpush.msra.mxu0 0.0
      %516 = vmatpush.msra.mxu0 0.0
      %517 = vmatpush.msra.mxu0 0.0
      %518 = vmatpush.msra.mxu0 %v489
      %519 = vmatpush.msra.mxu0 %v488
      %520 = vmatpush.msra.mxu0 %v487
      %521 = vmatpush.msra.mxu0 %v486
      %522 = vmatmul.f32.gmra.mxu0 %v495
      %v523 = vpop.f32.mrf.mxu0
      %v524 = vadd.f32 %v492, %v523
      %525 = vmatmul.f32.gmra.mxu0 %v498
      %v526 = vpop.f32.mrf.mxu0
      %v527 = vadd.f32 %v492, %v526
      %528 = vmatmul.f32.gmra.mxu0 %v501
      %v529 = vpop.f32.mrf.mxu0
      %v530 = vadd.f32 %v492, %v529
      %531 = vmatmul.f32.gmra.mxu0 %v504
      %v532 = vpop.f32.mrf.mxu0
      %v533 = vadd.f32 %v492, %v532
      %534 = vdwg.mxu0
      %v535 = vmax.f32 %v524, 0.0
      %v536 = vmax.f32 %v527, 0.0
      %v537 = vmax.f32 %v530, 0.0
      %v538 = vmax.f32 %v533, 0.0
      %v539 = vand.u32 2147483647, %v524
      %v540 = vand.u32 2147483647, %v527
      %v541 = vand.u32 2147483647, %v530
      %v542 = vand.u32 2147483647, %v533
      %v543 = vsub.f32 0.0, %v539
      %v544 = vsub.f32 0.0, %v540
      %v545 = vsub.f32 0.0, %v541
      %v546 = vsub.f32 0.0, %v542
      %v547 = vmul.f32 %v543, 1.442695
      %v548 = vpow.pop %v547
      %v549 = vmul.f32 %v544, 1.442695
      %v550 = vpow.pop %v549
      %v551 = vmul.f32 %v545, 1.442695
      %v552 = vpow.pop %v551
      %v553 = vmul.f32 %v546, 1.442695
      %v554 = vpow.pop %v553
      %v555 = vadd.f32 %v548, 1.0
      %v556 = vlog2.pop %v555
      %v557 = vmul.f32 %v556, 0.6931472
      %v558 = vmul.f32 -0.5, %v548
      %v559 = vadd.f32 %v558, 1.0
      %v560 = vmul.f32 %v559, %v548
      %v561 = vand.u32 2147483647, %v548
      %vm562 = vcmp.lt.f32.partialorder %v561, 0.0004427343
      %v563 = vsel %vm562, %v560, %v557
      %v564 = vadd.f32 %v550, 1.0
      %v565 = vlog2.pop %v564
      %v566 = vmul.f32 %v565, 0.6931472
      %v567 = vmul.f32 -0.5, %v550
      %v568 = vadd.f32 %v567, 1.0
      %v569 = vmul.f32 %v568, %v550
      %v570 = vand.u32 2147483647, %v550
      %vm571 = vcmp.lt.f32.partialorder %v570, 0.0004427343
      %v572 = vsel %vm571, %v569, %v566
      %v573 = vadd.f32 %v552, 1.0
      %v574 = vlog2.pop %v573
      %v575 = vmul.f32 %v574, 0.6931472
      %v576 = vmul.f32 -0.5, %v552
      %v577 = vadd.f32 %v576, 1.0
      %v578 = vmul.f32 %v577, %v552
      %v579 = vand.u32 2147483647, %v552
      %vm580 = vcmp.lt.f32.partialorder %v579, 0.0004427343
      %v581 = vsel %vm580, %v578, %v575
      %v582 = vadd.f32 %v554, 1.0
      %v583 = vlog2.pop %v582
      %v584 = vmul.f32 %v583, 0.6931472
      %v585 = vmul.f32 -0.5, %v554
      %v586 = vadd.f32 %v585, 1.0
      %v587 = vmul.f32 %v586, %v554
      %v588 = vand.u32 2147483647, %v554
      %vm589 = vcmp.lt.f32.partialorder %v588, 0.0004427343
      %v590 = vsel %vm589, %v587, %v584
      %v591 = vadd.f32 %v535, %v563
      %v592 = vadd.f32 %v536, %v572
      %v593 = vadd.f32 %v537, %v581
      %v594 = vadd.f32 %v538, %v590
      %599 = vrot.lane.b32.xlu0 %v376, 8
      %v600 = vpop.permute.xlu0 %599
      %601 = vrot.lane.b32.xlu0 %v377, 8
      %v602 = vpop.permute.xlu0 %601
      %603 = vrot.lane.b32.xlu0 %v378, 8
      %v604 = vpop.permute.xlu0 %603
      %605 = vrot.lane.b32.xlu0 %v379, 8
      %v606 = vpop.permute.xlu0 %605
      %v611 = vmul.f32 %v591, %v600
      %v612 = vmul.f32 %v592, %v602
      %v613 = vmul.f32 %v593, %v604
      %v614 = vmul.f32 %v594, %v606
      %619 = vrot.lane.b32.xlu0 %v611, 120
      %v620 = vpop.permute.xlu0 %619
      %621 = vrot.lane.b32.xlu0 %v612, 120
      %v622 = vpop.permute.xlu0 %621
      %623 = vrot.lane.b32.xlu0 %v613, 120
      %v624 = vpop.permute.xlu0 %623
      %625 = vrot.lane.b32.xlu0 %v614, 120
      %v626 = vpop.permute.xlu0 %625
      %v631 = vadd.f32 %v524, %v620
      %v632 = vadd.f32 %v527, %v622
      %v633 = vadd.f32 %v530, %v624
      %v634 = vadd.f32 %v533, %v626
      %v635 = vtanh.pop %v631
      %v636 = vtanh.pop %v632
      %v637 = vtanh.pop %v633
      %v638 = vtanh.pop %v634
      %v639 = vmul.f32 %v376, %v376
      %v640 = vmul.f32 %v377, %v377
      %v641 = vmul.f32 %v378, %v378
      %v642 = vmul.f32 %v379, %v379
      %v643 = vmul.f32 %v639, -0.5
      %v644 = vmul.f32 %v640, -0.5
      %v645 = vmul.f32 %v641, -0.5
      %v646 = vmul.f32 %v642, -0.5
      %v647 = vlog2.pop %v591
      %v648 = vmul.f32 %v647, 0.6931472
      %v649 = vlog2.pop %v592
      %v650 = vmul.f32 %v649, 0.6931472
      %v651 = vlog2.pop %v593
      %v652 = vmul.f32 %v651, 0.6931472
      %v653 = vlog2.pop %v594
      %v654 = vmul.f32 %v653, 0.6931472
      %659 = vrot.lane.b32.xlu0 %v648, 120
      %v660 = vpop.permute.xlu0 %659
      %661 = vrot.lane.b32.xlu0 %v650, 120
      %v662 = vpop.permute.xlu0 %661
      %663 = vrot.lane.b32.xlu0 %v652, 120
      %v664 = vpop.permute.xlu0 %663
      %665 = vrot.lane.b32.xlu0 %v654, 120
      %v666 = vpop.permute.xlu0 %665
      %v671 = vsub.f32 %v643, %v660
      %v672 = vsub.f32 %v644, %v662
      %v673 = vsub.f32 %v645, %v664
      %v674 = vsub.f32 %v646, %v666
      %v675 = vsub.f32 %v671, 0.9189385
      %v676 = vsub.f32 %v672, 0.9189385
      %v677 = vsub.f32 %v673, 0.9189385
      %v678 = vsub.f32 %v674, 0.9189385
      %v679 = vtanh.pop %v635
      %v680 = vtanh.pop %v636
      %v681 = vtanh.pop %v637
      %v682 = vtanh.pop %v638
      %v683 = vmul.f32 %v679, %v679
      %v684 = vmul.f32 %v680, %v680
      %v685 = vmul.f32 %v681, %v681
      %v686 = vmul.f32 %v682, %v682
      %v687 = vsub.f32 1.0, %v683
      %v688 = vsub.f32 1.0, %v684
      %v689 = vsub.f32 1.0, %v685
      %v690 = vsub.f32 1.0, %v686
      %v691 = vadd.f32 %v687, 1e-07
      %v692 = vadd.f32 %v688, 1e-07
      %v693 = vadd.f32 %v689, 1e-07
      %v694 = vadd.f32 %v690, 1e-07
      %v695 = vlog2.pop %v691
      %v696 = vmul.f32 %v695, 0.6931472
      %v697 = vlog2.pop %v692
      %v698 = vmul.f32 %v697, 0.6931472
      %v699 = vlog2.pop %v693
      %v700 = vmul.f32 %v699, 0.6931472
      %v701 = vlog2.pop %v694
      %v702 = vmul.f32 %v701, 0.6931472
      %v703 = vsub.f32 %v675, %v696
      %v704 = vsub.f32 %v676, %v698
      %v705 = vsub.f32 %v677, %v700
      %v706 = vsub.f32 %v678, %v702
      %v707 = vmul.f32 %v635, 2.0
      %v708 = vmul.f32 %v636, 2.0
      %v709 = vmul.f32 %v637, 2.0
      %v710 = vmul.f32 %v638, 2.0
      %vm711 = vcmask 64512
      %712 = vst.msk [vmem:[%s364] sm:$0xff] %vm711, %v707
      %713 = vst.msk [vmem:[%s364 + $0x8] sm:$0xff] %vm711, %v708
      %714 = vst.msk [vmem:[%s364 + $0x10] sm:$0xff] %vm711, %v709
      %715 = vst.msk [vmem:[%s364 + $0x18] sm:$0xff] %vm711, %v710
      %716 = vst.msk [vmem:[%s370] sm:$0xff] %vm711, %v703
      %717 = vst.msk [vmem:[%s370 + $0x8] sm:$0xff] %vm711, %v704
      %718 = vst.msk [vmem:[%s370 + $0x10] sm:$0xff] %vm711, %v705
      %719 = vst.msk [vmem:[%s370 + $0x18] sm:$0xff] %vm711, %v706
      %s720 = smul.u32 4, %s21
      %p721 = scmp.lt.s32.totalorder %s720, 7
      %s722 = scalar_select %p721, %s720, 7
      %s723 = smul.addr %s722, 8
      %s724 = scalar_lea.vmem %s8, %s723
      %s725 = smul.u32 4, %s21
      %p726 = scmp.lt.s32.totalorder %s725, 7
      %s727 = scalar_select %p726, %s725, 7
      %s728 = smul.addr %s727, 8
      %s729 = scalar_lea.vmem %s9, %s728
      // Predicated region
      $region53: #{policy_forward.1} parent=51 // pred_check
        %p730 = pneg %p217
      $region54: #{policy_forward.1} parent=51 // pred_check_branch
        %732 = sbr.rel (%p730) target = $region56
      $region55: #{policy_forward.1} parent=51 // pred_region
        %s733 = smul.u32 4, %s21
      $region56: #{policy_forward.1} parent=51 // pred_fallthru
        _
      // Predicated region
      $region57: #{policy_forward.1} parent=51 // pred_check
        %p734 = pneg %p243
      $region58: #{policy_forward.1} parent=51 // pred_check_branch
        %736 = sbr.rel (%p734) target = $region60
      $region59: #{policy_forward.1} parent=51 // pred_region
        %s737 = smul.u32 4, %s21
      $region60: #{policy_forward.1} parent=51 // pred_fallthru
        _
    $region52: #{policy_forward.1} parent=5 // pred_fallthru
      _
    %p738 = scmp.le.s32.totalorder 2, %s16
    // Predicated region
    $region61: #{policy_forward.1} parent=5 // pred_check
      %p739 = pneg %p738
    $region62: #{policy_forward.1} parent=5 // pred_check_branch
      %741 = sbr.rel (%p739) target = $region64
    $region63: #{policy_forward.1} parent=5 // pred_region
      %s742 = ssub.s32 %s16, 2
      // Predicated region
      $region65: #{policy_forward.1} parent=63 // pred_check
        %p743 = pneg %p223
      $region66: #{policy_forward.1} parent=63 // pred_check_branch
        %745 = sbr.rel (%p743) target = $region68
      $region67: #{policy_forward.1} parent=63 // pred_region
        %s746 = smul.u32 4, %s22
        %p747 = scmp.lt.s32.totalorder %s746, 7
        %s748 = scalar_select %p747, %s746, 7
        %s749 = smul.addr %s748, 8
        %s750 = scalar_lea.vmem %s8, %s749
      $region68: #{policy_forward.1} parent=63 // pred_fallthru
        _
      // Predicated region
      $region69: #{policy_forward.1} parent=63 // pred_check
        %p751 = pneg %p249
      $region70: #{policy_forward.1} parent=63 // pred_check_branch
        %753 = sbr.rel (%p751) target = $region72
      $region71: #{policy_forward.1} parent=63 // pred_region
        %s754 = smul.u32 4, %s22
        %p755 = scmp.lt.s32.totalorder %s754, 7
        %s756 = scalar_select %p755, %s754, 7
        %s757 = smul.addr %s756, 8
        %s758 = scalar_lea.vmem %s9, %s757
      $region72: #{policy_forward.1} parent=63 // pred_fallthru
        _
    $region64: #{policy_forward.1} parent=5 // pred_fallthru
      _
  $region6: #{policy_forward.1} parent=0 // loop_footer
    %s20 = sadd.s32 1, %s16
  $region7: #{policy_forward.1} parent=0 // loop_footer_branch
    %15 = sbr.rel target = $region3
  $region8: #{policy_forward.1} parent=0 // loop_exit
    _

</llo_original>
